<compile_context>
chip_gen: v7x
topology: tpu7x:2x2x1
jax: 0.10.0
libtpu: 0.0.40
codegen_flags: <defaults>
</compile_context>

<pallas_src>
import functools

import jax
import jax.numpy as jnp
from jax.experimental import pallas as pl
from jax.experimental.pallas import tpu as pltpu


def _silu(x):
    return x * jax.nn.sigmoid(x)


def _round_up(x, m):
    return (x + m - 1) // m * m


def energy_mlp_kernel(x_ref, w1_ref, b1_ref, w2_ref, b2_ref, w3_ref, b3_ref,
                      o_ref):
    """Fused 3-layer MLP: (tile_R, F) -> (tile_R, 1)."""
    # Layer 1: Linear(F, F) + SiLU.  bf16 MXU inputs, f32 accumulation.
    x = x_ref[...].astype(jnp.bfloat16)
    h = jnp.dot(x, w1_ref[...], preferred_element_type=jnp.float32)
    h = _silu(h + b1_ref[...])                     # f32 elementwise (v5e-safe)

    # Layer 2: Linear(F, F) + SiLU.
    h = jnp.dot(h.astype(jnp.bfloat16), w2_ref[...],
                preferred_element_type=jnp.float32)
    h = _silu(h + b2_ref[...])

    # Layer 3: Linear(F, 1) as VPU multiply + lane reduce (keeps MXU free).
    e = jnp.sum(h * w3_ref[...], axis=-1, keepdims=True) + b3_ref[...]
    o_ref[...] = e.astype(o_ref.dtype)


@functools.partial(jax.jit, static_argnames=("tile_rows",))
def energy_output(atom_node, params, *, tile_rows=1024):
    """atom_node: (batch, n_atoms, n_features) -> energy: (batch, n_atoms, 1)."""
    w1, b1, w2, b2, w3, b3 = params
    batch, n_atoms, n_feat = atom_node.shape
    rows = batch * n_atoms

    # Row tile: large tiles amortise the ~600-cycle per-grid-step overhead and
    # give the MXU a big M, but never larger than the (8-aligned) row count so
    # tiny inputs are not over-padded.
    tile = _round_up(max(int(tile_rows), 8), 8)
    tile = min(tile, _round_up(rows, 8))
    rows_p = _round_up(rows, tile)

    x2d = atom_node.reshape(rows, n_feat)
    if rows_p != rows:
        x2d = jnp.pad(x2d, ((0, rows_p - rows), (0, 0)))

    # bf16 weights for the MXU; biases and the final projection row stay f32
    # (they feed the VPU / EUP path).
    w1_bf = w1.astype(jnp.bfloat16)
    w2_bf = w2.astype(jnp.bfloat16)
    b1_2d = b1.reshape(1, n_feat).astype(jnp.float32)
    b2_2d = b2.reshape(1, n_feat).astype(jnp.float32)
    w3_row = w3.reshape(1, n_feat).astype(jnp.float32)   # (F,1) -> (1,F)
    b3_2d = b3.reshape(1, 1).astype(jnp.float32)

    grid = (rows_p // tile,)

    out = pl.pallas_call(
        energy_mlp_kernel,
        out_shape=jax.ShapeDtypeStruct((rows_p, 1), atom_node.dtype),
        grid_spec=pltpu.PrefetchScalarGridSpec(
            num_scalar_prefetch=0,
            grid=grid,
            in_specs=[
                pl.BlockSpec((tile, n_feat), lambda i: (i, 0)),    # x tile
                pl.BlockSpec((n_feat, n_feat), lambda i: (0, 0)),  # w1 (resident)
                pl.BlockSpec((1, n_feat), lambda i: (0, 0)),       # b1
                pl.BlockSpec((n_feat, n_feat), lambda i: (0, 0)),  # w2 (resident)
                pl.BlockSpec((1, n_feat), lambda i: (0, 0)),       # b2
                pl.BlockSpec((1, n_feat), lambda i: (0, 0)),       # w3 row
                pl.BlockSpec((1, 1), lambda i: (0, 0)),            # b3
            ],
            out_specs=pl.BlockSpec((tile, 1), lambda i: (i, 0)),
        ),
        compiler_params=pltpu.CompilerParams(
            dimension_semantics=("parallel",)),
    )(x2d, w1_bf, b1_2d, w2_bf, b2_2d, w3_row, b3_2d)

    return out[:rows].reshape(batch, n_atoms, 1)


def init_params(key, n_features, dtype=jnp.float32):
    """Deterministic init matching nn.Linear shapes (weights stored as (in, out))."""
    k = jax.random.split(key, 6)
    s1 = 1.0 / jnp.sqrt(n_features)
    w1 = jax.random.uniform(k[0], (n_features, n_features), dtype, -s1, s1)
    b1 = jax.random.uniform(k[1], (n_features,), dtype, -s1, s1)
    w2 = jax.random.uniform(k[2], (n_features, n_features), dtype, -s1, s1)
    b2 = jax.random.uniform(k[3], (n_features,), dtype, -s1, s1)
    w3 = jax.random.uniform(k[4], (n_features, 1), dtype, -s1, s1)
    b3 = jax.random.uniform(k[5], (1,), dtype, -s1, s1)
    return (w1, b1, w2, b2, w3, b3)


def energy_output_ref(atom_node, params):
    """Pure-JAX f32 reference of the PyTorch forward."""
    w1, b1, w2, b2, w3, b3 = params
    h = _silu(atom_node @ w1 + b1)
    h = _silu(h @ w2 + b2)
    return h @ w3 + b3


if __name__ == "__main__":
    key = jax.random.PRNGKey(0)
    k_x, k_p, k_y = jax.random.split(key, 3)

    batch, n_atoms, n_features = 2, 16, 64
    atom_node = jax.random.normal(k_x, (batch, n_atoms, n_features),
                                  dtype=jnp.float32)
    params = init_params(k_p, n_features)

    energy = energy_output(atom_node, params)
    energy = jax.block_until_ready(energy)

    ref = energy_output_ref(atom_node, params)
    assert energy.shape == (batch, n_atoms, 1)
    # Tolerance loosened vs the pure-f32 reference because the FxF matmuls run
    # with bf16 inputs (f32 accumulation) on the MXU.
    assert jnp.allclose(energy, ref, atol=2e-2, rtol=2e-2), "mismatch vs reference"

    # Exercise the padding path (rows not a multiple of 8 / of the tile).
    atom_node2 = jax.random.normal(k_y, (1, 7, n_features), dtype=jnp.float32)
    energy2 = jax.block_until_ready(energy_output(atom_node2, params))
    ref2 = energy_output_ref(atom_node2, params)
    assert energy2.shape == (1, 7, 1)
    assert jnp.allclose(energy2, ref2, atol=2e-2, rtol=2e-2), "mismatch (padded)"

    print("KERNEL_OK")
</pallas_src>

<mosaic_0001>
module attributes {stable_mosaic.version = 11 : i64} {
  func.func @energy_mlp_kernel(%arg0: i32, %arg1: memref<32x64xf32, #tpu.memory_space<vmem>>, %arg2: memref<64x64xbf16, #tpu.memory_space<vmem>>, %arg3: memref<1x64xf32, #tpu.memory_space<vmem>>, %arg4: memref<64x64xbf16, #tpu.memory_space<vmem>>, %arg5: memref<1x64xf32, #tpu.memory_space<vmem>>, %arg6: memref<1x64xf32, #tpu.memory_space<vmem>>, %arg7: memref<1x1xf32, #tpu.memory_space<vmem>>, %arg8: memref<32x1xf32, #tpu.memory_space<vmem>>) attributes {dimension_semantics = [#tpu.dimension_semantics<parallel>], iteration_bounds = array<i64: 1>, scalar_prefetch = 0 : i64, scratch_operands = 0 : i64, tpu.core_type = #tpu.core_type<tc>, window_params = [{transform_indices = @transform_0, window_bounds = array<i64: 32, 64>}, {pipeline_mode = #tpu.pipeline_mode<synchronous>, transform_indices = @transform_1, window_bounds = array<i64: 64, 64>}, {pipeline_mode = #tpu.pipeline_mode<synchronous>, transform_indices = @transform_2, window_bounds = array<i64: 1, 64>}, {pipeline_mode = #tpu.pipeline_mode<synchronous>, transform_indices = @transform_3, window_bounds = array<i64: 64, 64>}, {pipeline_mode = #tpu.pipeline_mode<synchronous>, transform_indices = @transform_4, window_bounds = array<i64: 1, 64>}, {pipeline_mode = #tpu.pipeline_mode<synchronous>, transform_indices = @transform_5, window_bounds = array<i64: 1, 64>}, {pipeline_mode = #tpu.pipeline_mode<synchronous>, transform_indices = @transform_6, window_bounds = array<i64: 1, 1>}, {transform_indices = @transform_7, window_bounds = array<i64: 32, 1>}]} {
    %c0 = arith.constant 0 : index
    %c0_0 = arith.constant 0 : index
    %0 = vector.load %arg1[%c0, %c0_0] : memref<32x64xf32, #tpu.memory_space<vmem>>, vector<32x64xf32>
    %1 = arith.truncf %0 : vector<32x64xf32> to vector<32x64xbf16>
    %c0_1 = arith.constant 0 : index
    %c0_2 = arith.constant 0 : index
    %2 = vector.load %arg2[%c0_1, %c0_2] : memref<64x64xbf16, #tpu.memory_space<vmem>>, vector<64x64xbf16>
    %cst = arith.constant dense<0.000000e+00> : vector<32x64xf32>
    %3 = tpu.matmul %1, %2, %cst {dimension_numbers = #tpu.dot_dimension_numbers<[1], [0], [0], [1], [0, 0, 1, 1], [], []>} : vector<32x64xbf16>, vector<64x64xbf16>, vector<32x64xf32> -> vector<32x64xf32>
    %c0_3 = arith.constant 0 : index
    %c0_4 = arith.constant 0 : index
    %4 = vector.load %arg3[%c0_3, %c0_4] : memref<1x64xf32, #tpu.memory_space<vmem>>, vector<1x64xf32>
    %5 = vector.broadcast %4 : vector<1x64xf32> to vector<32x64xf32>
    %6 = arith.addf %3, %5 : vector<32x64xf32>
    %7 = arith.negf %6 : vector<32x64xf32>
    %8 = math.exp %7 : vector<32x64xf32>
    %cst_5 = arith.constant 1.000000e+00 : f32
    %9 = vector.broadcast %cst_5 : f32 to vector<32x64xf32>
    %10 = arith.addf %9, %8 : vector<32x64xf32>
    %11 = arith.divf %9, %10 : vector<32x64xf32>
    %12 = arith.mulf %6, %11 : vector<32x64xf32>
    %13 = arith.truncf %12 : vector<32x64xf32> to vector<32x64xbf16>
    %c0_6 = arith.constant 0 : index
    %c0_7 = arith.constant 0 : index
    %14 = vector.load %arg4[%c0_6, %c0_7] : memref<64x64xbf16, #tpu.memory_space<vmem>>, vector<64x64xbf16>
    %cst_8 = arith.constant dense<0.000000e+00> : vector<32x64xf32>
    %15 = tpu.matmul %13, %14, %cst_8 {dimension_numbers = #tpu.dot_dimension_numbers<[1], [0], [0], [1], [0, 0, 1, 1], [], []>} : vector<32x64xbf16>, vector<64x64xbf16>, vector<32x64xf32> -> vector<32x64xf32>
    %c0_9 = arith.constant 0 : index
    %c0_10 = arith.constant 0 : index
    %16 = vector.load %arg5[%c0_9, %c0_10] : memref<1x64xf32, #tpu.memory_space<vmem>>, vector<1x64xf32>
    %17 = vector.broadcast %16 : vector<1x64xf32> to vector<32x64xf32>
    %18 = arith.addf %15, %17 : vector<32x64xf32>
    %19 = arith.negf %18 : vector<32x64xf32>
    %20 = math.exp %19 : vector<32x64xf32>
    %cst_11 = arith.constant 1.000000e+00 : f32
    %21 = vector.broadcast %cst_11 : f32 to vector<32x64xf32>
    %22 = arith.addf %21, %20 : vector<32x64xf32>
    %23 = arith.divf %21, %22 : vector<32x64xf32>
    %24 = arith.mulf %18, %23 : vector<32x64xf32>
    %c0_12 = arith.constant 0 : index
    %c0_13 = arith.constant 0 : index
    %25 = vector.load %arg6[%c0_12, %c0_13] : memref<1x64xf32, #tpu.memory_space<vmem>>, vector<1x64xf32>
    %26 = vector.broadcast %25 : vector<1x64xf32> to vector<32x64xf32>
    %27 = arith.mulf %24, %26 : vector<32x64xf32>
    %cst_14 = arith.constant dense<0.000000e+00> : vector<32xf32>
    %28 = vector.multi_reduction <add>, %27, %cst_14 [1] : vector<32x64xf32> to vector<32xf32>
    %29 = vector.shape_cast %28 : vector<32xf32> to vector<32x1xf32>
    %c0_15 = arith.constant 0 : index
    %c0_16 = arith.constant 0 : index
    %30 = vector.load %arg7[%c0_15, %c0_16] : memref<1x1xf32, #tpu.memory_space<vmem>>, vector<1x1xf32>
    %31 = vector.broadcast %30 : vector<1x1xf32> to vector<32x1xf32>
    %32 = arith.addf %29, %31 : vector<32x1xf32>
    %c0_17 = arith.constant 0 : index
    %c0_18 = arith.constant 0 : index
    %33 = vector.load %arg8[%c0_17, %c0_18] : memref<32x1xf32, #tpu.memory_space<vmem>>, vector<32x1xf32>
    tpu.vector_store %arg8[%c0_17, %c0_18], %32 {strides = array<i32>} : memref<32x1xf32, #tpu.memory_space<vmem>>, vector<32x1xf32>,
    return
  }
  func.func @transform_0(%arg0: i32) -> (i32, i32) {
    %c0_i32 = arith.constant 0 : i32
    %c0_i32_0 = arith.constant 0 : i32
    return %arg0, %c0_i32 : i32, i32
  }
  func.func @transform_1(%arg0: i32) -> (i32, i32) {
    %c0_i32 = arith.constant 0 : i32
    %c0_i32_0 = arith.constant 0 : i32
    %c0_i32_1 = arith.constant 0 : i32
    return %c0_i32, %c0_i32_0 : i32, i32
  }
  func.func @transform_2(%arg0: i32) -> (i32, i32) {
    %c0_i32 = arith.constant 0 : i32
    %c0_i32_0 = arith.constant 0 : i32
    %c0_i32_1 = arith.constant 0 : i32
    return %c0_i32, %c0_i32_0 : i32, i32
  }
  func.func @transform_3(%arg0: i32) -> (i32, i32) {
    %c0_i32 = arith.constant 0 : i32
    %c0_i32_0 = arith.constant 0 : i32
    %c0_i32_1 = arith.constant 0 : i32
    return %c0_i32, %c0_i32_0 : i32, i32
  }
  func.func @transform_4(%arg0: i32) -> (i32, i32) {
    %c0_i32 = arith.constant 0 : i32
    %c0_i32_0 = arith.constant 0 : i32
    %c0_i32_1 = arith.constant 0 : i32
    return %c0_i32, %c0_i32_0 : i32, i32
  }
  func.func @transform_5(%arg0: i32) -> (i32, i32) {
    %c0_i32 = arith.constant 0 : i32
    %c0_i32_0 = arith.constant 0 : i32
    %c0_i32_1 = arith.constant 0 : i32
    return %c0_i32, %c0_i32_0 : i32, i32
  }
  func.func @transform_6(%arg0: i32) -> (i32, i32) {
    %c0_i32 = arith.constant 0 : i32
    %c0_i32_0 = arith.constant 0 : i32
    %c0_i32_1 = arith.constant 0 : i32
    return %c0_i32, %c0_i32_0 : i32, i32
  }
  func.func @transform_7(%arg0: i32) -> (i32, i32) {
    %c0_i32 = arith.constant 0 : i32
    %c0_i32_0 = arith.constant 0 : i32
    return %arg0, %c0_i32 : i32, i32
  }
}

</mosaic_0001>

<llo_original>
// kernel: energy_output.1
$region0: #{energy_output.1}
  #allocation0 [shape = 'u32[]', space=smem, size = 0x4, offset = 0x4, fixed_abs, tag = 'smem constant byte address 0x4 - core index']
  #allocation1 [shape = 'u32[144,128]{1,0:T(1,128)}', space=vmem, size = 0x12000, scoped, tag = 'internal scratch']
  #allocation2 [shape = 'f32[1,1]{1,0:T(1,128)S(1)}', space=vmem, size = 0x200, scoped, tag = 'scoped memory for energy_output.1']
  %s0 = inlined_call_operand.vmem [shape: f32[32,64], index: 0, kind: input, shape index: {}]
  %s1 = inlined_call_operand.vmem [shape: bf16[64,64], index: 1, kind: input, shape index: {}]
  %s2 = inlined_call_operand.vmem [shape: f32[1,64], index: 2, kind: input, shape index: {}]
  %s3 = inlined_call_operand.vmem [shape: bf16[64,64], index: 3, kind: input, shape index: {}]
  %s4 = inlined_call_operand.vmem [shape: f32[1,64], index: 4, kind: input, shape index: {}]
  %s5 = inlined_call_operand.vmem [shape: f32[1,64], index: 5, kind: input, shape index: {}]
  %s6 = inlined_call_operand.<no memory space> [shape: f32[1,1], index: 6, kind: input, shape index: {}]
  %s7 = inlined_call_operand.vmem [shape: f32[32,1], index: 7, kind: output, shape index: {}]
  %s8 = sld [smem:[#allocation0]]
  $region38: #{energy_output.1} parent=0
    _
  %s10 = ssub.s32 1, %s8
  %s11 = scalar_select 0, %s10, %s8
  %v12 = vstv %s6
  %13 = vst [vmem:[#allocation2] sm:$0x1] %v12
  // Predicated region
  $region2: #{energy_output.1} parent=0 // pred_check
    _
  $region3: #{energy_output.1} parent=0 // pred_check_branch
    %15 = sbr.rel (0) target = $region5
  $region4: #{energy_output.1} parent=0 // pred_region
    _
  $region5: #{energy_output.1} parent=0 // pred_fallthru
    _
  // Predicated region
  $region6: #{energy_output.1} parent=0 // pred_check
    _
  $region7: #{energy_output.1} parent=0 // pred_check_branch
    %17 = sbr.rel (0) target = $region9
  $region8: #{energy_output.1} parent=0 // pred_region
    _
  $region9: #{energy_output.1} parent=0 // pred_fallthru
    _
  // Predicated region
  $region10: #{energy_output.1} parent=0 // pred_check
    _
  $region11: #{energy_output.1} parent=0 // pred_check_branch
    %19 = sbr.rel (0) target = $region13
  $region12: #{energy_output.1} parent=0 // pred_region
    _
  $region13: #{energy_output.1} parent=0 // pred_fallthru
    _
  // Predicated region
  $region14: #{energy_output.1} parent=0 // pred_check
    _
  $region15: #{energy_output.1} parent=0 // pred_check_branch
    %21 = sbr.rel (0) target = $region17
  $region16: #{energy_output.1} parent=0 // pred_region
    _
  $region17: #{energy_output.1} parent=0 // pred_fallthru
    _
  // Predicated region
  $region18: #{energy_output.1} parent=0 // pred_check
    _
  $region19: #{energy_output.1} parent=0 // pred_check_branch
    %23 = sbr.rel (0) target = $region21
  $region20: #{energy_output.1} parent=0 // pred_region
    _
  $region21: #{energy_output.1} parent=0 // pred_fallthru
    _
  // Predicated region
  $region22: #{energy_output.1} parent=0 // pred_check
    _
  $region23: #{energy_output.1} parent=0 // pred_check_branch
    %25 = sbr.rel (0) target = $region25
  $region24: #{energy_output.1} parent=0 // pred_region
    _
  $region25: #{energy_output.1} parent=0 // pred_fallthru
    _
  // Predicated region
  $region26: #{energy_output.1} parent=0 // pred_check
    _
  $region27: #{energy_output.1} parent=0 // pred_check_branch
    %27 = sbr.rel (0) target = $region29
  $region28: #{energy_output.1} parent=0 // pred_region
    _
  $region29: #{energy_output.1} parent=0 // pred_fallthru
    _
  %v29 = vld [vmem:[%s0] sm:$0xff]
  %v30 = vld [vmem:[%s0 + $0x8] sm:$0xff]
  %v31 = vld [vmem:[%s0 + $0x10] sm:$0xff]
  %v32 = vld [vmem:[%s0 + $0x18] sm:$0xff]
  %v33 = vpack.c.bf16 %v30, %v29
  %v34 = vpack.c.bf16 %v32, %v31
  %v35 = vld [vmem:[%s1] sm:$0xf]
  %v36 = vld [vmem:[%s1 + $0x4] sm:$0xf]
  %v37 = vld [vmem:[%s1 + $0x8] sm:$0xf]
  %v38 = vld [vmem:[%s1 + $0xc] sm:$0xf]
  %v39 = vld [vmem:[%s1 + $0x10] sm:$0xf]
  %v40 = vld [vmem:[%s1 + $0x14] sm:$0xf]
  %v41 = vld [vmem:[%s1 + $0x18] sm:$0xf]
  %v42 = vld [vmem:[%s1 + $0x1c] sm:$0xf]
  %v43 = vld [vmem:[%s2] sm:$0x1]
  %v45 = vlaneseq
  %v46 = vshrl.u32 %v45, 7
  %v47 = vsub.s32 0, %v46
  %v48 = vrot.slane %v43, %v47
  %v58 = vunpack.c.l.b16 %v35
  %v59 = vunpack.c.l.b16 %v36
  %v60 = vunpack.c.l.b16 %v37
  %v61 = vunpack.c.l.b16 %v38
  %v62 = vunpack.c.l.b16 %v39
  %v63 = vunpack.c.l.b16 %v40
  %v64 = vunpack.c.l.b16 %v41
  %v65 = vunpack.c.l.b16 %v42
  %v66 = vpack.c.b16 %v59, %v58
  %v67 = vpack.c.b16 %v61, %v60
  %v68 = vpack.c.b16 %v63, %v62
  %v69 = vpack.c.b16 %v65, %v64
  %vm74 = vcmask 523264
  %v76 = vsel %vm74, %v33, 0
  %v79 = vsel %vm74, %v34, 0
  %81 = vmatprep.subr.bf16.mxu0 0
  %82 = vmatpush1.bf16.msra.mxu0 %v66
  %83 = vmatprep.subr.bf16.mxu0 0
  %84 = vmatpush1.bf16.msra.mxu0 %v67
  %85 = vmatprep.subr.bf16.mxu0 0
  %86 = vmatpush1.bf16.msra.mxu0 %v68
  %87 = vmatprep.subr.bf16.mxu0 0
  %88 = vmatpush1.bf16.msra.mxu0 %v69
  %89 = vmatprep.subr.bf16.mxu0 0
  %90 = vmatpush1.bf16.msra.mxu0 0
  %91 = vmatprep.subr.bf16.mxu0 0
  %92 = vmatpush1.bf16.msra.mxu0 0
  %93 = vmatprep.subr.bf16.mxu0 0
  %94 = vmatpush1.bf16.msra.mxu0 0
  %95 = vmatprep.subr.bf16.mxu0 0
  %96 = vmatpush1.bf16.msra.mxu0 0
  %97 = vmatprep.subr.bf16.mxu0 0
  %98 = vmatpush1.bf16.msra.mxu0 0
  %99 = vmatprep.subr.bf16.mxu0 0
  %100 = vmatpush1.bf16.msra.mxu0 0
  %101 = vmatprep.subr.bf16.mxu0 0
  %102 = vmatpush1.bf16.msra.mxu0 0
  %103 = vmatprep.subr.bf16.mxu0 0
  %104 = vmatpush1.bf16.msra.mxu0 0
  %105 = vmatprep.subr.bf16.mxu0 0
  %106 = vmatpush1.bf16.msra.mxu0 0
  %107 = vmatprep.subr.bf16.mxu0 0
  %108 = vmatpush1.bf16.msra.mxu0 0
  %109 = vmatprep.subr.bf16.mxu0 0
  %110 = vmatpush1.bf16.msra.mxu0 0
  %111 = vmatprep.subr.bf16.mxu0 0
  %112 = vmatpush1.bf16.msra.mxu0 0
  %113 = vmatprep.mubr.bf16.mxu0 0
  %114 = vmatmul.mubr.bf16.gmra.mrb[0].mxu0 %v76
  %v115 = vpop.f32.mrb[0].mxu0
  %v116 = vadd.f32 %v48, %v115
  %v117 = vpop.f32.mrb[0].mxu0
  %v118 = vpop.f32.mrb[0].mxu0
  %v119 = vadd.f32 %v48, %v118
  %v120 = vpop.f32.mrb[0].mxu0
  %121 = vmatprep.mubr.bf16.mxu0 0
  %122 = vmatmul.mubr.bf16.gmra.mrb[0].mxu0 %v79
  %v123 = vpop.f32.mrb[0].mxu0
  %v124 = vadd.f32 %v48, %v123
  %v125 = vpop.f32.mrb[0].mxu0
  %v126 = vpop.f32.mrb[0].mxu0
  %v127 = vadd.f32 %v48, %v126
  %v128 = vpop.f32.mrb[0].mxu0
  %129 = vdwg.mxu0
  %v130 = vxor.u32 %v116, 2147483648
  %v131 = vxor.u32 %v119, 2147483648
  %v132 = vxor.u32 %v124, 2147483648
  %v133 = vxor.u32 %v127, 2147483648
  %v134 = vmul.f32 %v130, 1.442695
  %v135 = vpow.pop %v134
  %v136 = vmul.f32 %v131, 1.442695
  %v137 = vpow.pop %v136
  %v138 = vmul.f32 %v132, 1.442695
  %v139 = vpow.pop %v138
  %v140 = vmul.f32 %v133, 1.442695
  %v141 = vpow.pop %v140
  %v142 = vadd.f32 %v135, 1.0
  %v143 = vadd.f32 %v137, 1.0
  %v144 = vadd.f32 %v139, 1.0
  %v145 = vadd.f32 %v141, 1.0
  %v146 = vrcp.pop %v142
  %v147 = vmul.f32 1.0, %v146
  %v148 = vrcp.pop %v143
  %v149 = vmul.f32 1.0, %v148
  %v150 = vrcp.pop %v144
  %v151 = vmul.f32 1.0, %v150
  %v152 = vrcp.pop %v145
  %v153 = vmul.f32 1.0, %v152
  %v154 = vmul.f32 %v116, %v147
  %v155 = vmul.f32 %v119, %v149
  %v156 = vmul.f32 %v124, %v151
  %v157 = vmul.f32 %v127, %v153
  %v158 = vpack.c.bf16 %v155, %v154
  %v159 = vpack.c.bf16 %v157, %v156
  %v160 = vld [vmem:[%s3] sm:$0xf]
  %v161 = vld [vmem:[%s3 + $0x4] sm:$0xf]
  %v162 = vld [vmem:[%s3 + $0x8] sm:$0xf]
  %v163 = vld [vmem:[%s3 + $0xc] sm:$0xf]
  %v164 = vld [vmem:[%s3 + $0x10] sm:$0xf]
  %v165 = vld [vmem:[%s3 + $0x14] sm:$0xf]
  %v166 = vld [vmem:[%s3 + $0x18] sm:$0xf]
  %v167 = vld [vmem:[%s3 + $0x1c] sm:$0xf]
  %v168 = vld [vmem:[%s4] sm:$0x1]
  %v170 = vlaneseq
  %v171 = vshrl.u32 %v170, 7
  %v172 = vsub.s32 0, %v171
  %v173 = vrot.slane %v168, %v172
  %v183 = vunpack.c.l.b16 %v160
  %v184 = vunpack.c.l.b16 %v161
  %v185 = vunpack.c.l.b16 %v162
  %v186 = vunpack.c.l.b16 %v163
  %v187 = vunpack.c.l.b16 %v164
  %v188 = vunpack.c.l.b16 %v165
  %v189 = vunpack.c.l.b16 %v166
  %v190 = vunpack.c.l.b16 %v167
  %v191 = vpack.c.b16 %v184, %v183
  %v192 = vpack.c.b16 %v186, %v185
  %v193 = vpack.c.b16 %v188, %v187
  %v194 = vpack.c.b16 %v190, %v189
  %v200 = vsel %vm74, %v158, 0
  %v203 = vsel %vm74, %v159, 0
  %205 = vmatprep.subr.bf16.mxu0 0
  %206 = vmatpush1.bf16.msra.mxu0 %v191
  %207 = vmatprep.subr.bf16.mxu0 0
  %208 = vmatpush1.bf16.msra.mxu0 %v192
  %209 = vmatprep.subr.bf16.mxu0 0
  %210 = vmatpush1.bf16.msra.mxu0 %v193
  %211 = vmatprep.subr.bf16.mxu0 0
  %212 = vmatpush1.bf16.msra.mxu0 %v194
  %213 = vmatprep.subr.bf16.mxu0 0
  %214 = vmatpush1.bf16.msra.mxu0 0
  %215 = vmatprep.subr.bf16.mxu0 0
  %216 = vmatpush1.bf16.msra.mxu0 0
  %217 = vmatprep.subr.bf16.mxu0 0
  %218 = vmatpush1.bf16.msra.mxu0 0
  %219 = vmatprep.subr.bf16.mxu0 0
  %220 = vmatpush1.bf16.msra.mxu0 0
  %221 = vmatprep.subr.bf16.mxu0 0
  %222 = vmatpush1.bf16.msra.mxu0 0
  %223 = vmatprep.subr.bf16.mxu0 0
  %224 = vmatpush1.bf16.msra.mxu0 0
  %225 = vmatprep.subr.bf16.mxu0 0
  %226 = vmatpush1.bf16.msra.mxu0 0
  %227 = vmatprep.subr.bf16.mxu0 0
  %228 = vmatpush1.bf16.msra.mxu0 0
  %229 = vmatprep.subr.bf16.mxu0 0
  %230 = vmatpush1.bf16.msra.mxu0 0
  %231 = vmatprep.subr.bf16.mxu0 0
  %232 = vmatpush1.bf16.msra.mxu0 0
  %233 = vmatprep.subr.bf16.mxu0 0
  %234 = vmatpush1.bf16.msra.mxu0 0
  %235 = vmatprep.subr.bf16.mxu0 0
  %236 = vmatpush1.bf16.msra.mxu0 0
  %237 = vmatprep.mubr.bf16.mxu0 0
  %238 = vmatmul.mubr.bf16.gmra.mrb[0].mxu0 %v200
  %v239 = vpop.f32.mrb[0].mxu0
  %v240 = vadd.f32 %v173, %v239
  %v241 = vpop.f32.mrb[0].mxu0
  %v242 = vpop.f32.mrb[0].mxu0
  %v243 = vadd.f32 %v173, %v242
  %v244 = vpop.f32.mrb[0].mxu0
  %245 = vmatprep.mubr.bf16.mxu0 0
  %246 = vmatmul.mubr.bf16.gmra.mrb[0].mxu0 %v203
  %v247 = vpop.f32.mrb[0].mxu0
  %v248 = vadd.f32 %v173, %v247
  %v249 = vpop.f32.mrb[0].mxu0
  %v250 = vpop.f32.mrb[0].mxu0
  %v251 = vadd.f32 %v173, %v250
  %v252 = vpop.f32.mrb[0].mxu0
  %253 = vdwg.mxu0
  %v254 = vxor.u32 %v240, 2147483648
  %v255 = vxor.u32 %v243, 2147483648
  %v256 = vxor.u32 %v248, 2147483648
  %v257 = vxor.u32 %v251, 2147483648
  %v258 = vmul.f32 %v254, 1.442695
  %v259 = vpow.pop %v258
  %v260 = vmul.f32 %v255, 1.442695
  %v261 = vpow.pop %v260
  %v262 = vmul.f32 %v256, 1.442695
  %v263 = vpow.pop %v262
  %v264 = vmul.f32 %v257, 1.442695
  %v265 = vpow.pop %v264
  %v266 = vadd.f32 %v259, 1.0
  %v267 = vadd.f32 %v261, 1.0
  %v268 = vadd.f32 %v263, 1.0
  %v269 = vadd.f32 %v265, 1.0
  %v270 = vrcp.pop %v266
  %v271 = vmul.f32 1.0, %v270
  %v272 = vrcp.pop %v267
  %v273 = vmul.f32 1.0, %v272
  %v274 = vrcp.pop %v268
  %v275 = vmul.f32 1.0, %v274
  %v276 = vrcp.pop %v269
  %v277 = vmul.f32 1.0, %v276
  %v278 = vmul.f32 %v240, %v271
  %v279 = vmul.f32 %v243, %v273
  %v280 = vmul.f32 %v248, %v275
  %v281 = vmul.f32 %v251, %v277
  %v282 = vld [vmem:[%s5] sm:$0x1]
  %v284 = vlaneseq
  %v285 = vshrl.u32 %v284, 7
  %v286 = vsub.s32 0, %v285
  %v287 = vrot.slane %v282, %v286
  %v289 = vmul.f32 %v278, %v287
  %v290 = vmul.f32 %v279, %v287
  %v291 = vmul.f32 %v280, %v287
  %v292 = vmul.f32 %v281, %v287
  %v293 = vsel %vm74, %v289, 0.0
  %294 = vadd.xlane.f32.xlu0 %v293
  %v295 = vpop.xlane.xlu0 %294
  %v296 = vsel %vm74, %v290, 0.0
  %297 = vadd.xlane.f32.xlu0 %v296
  %v298 = vpop.xlane.xlu0 %297
  %v299 = vsel %vm74, %v291, 0.0
  %300 = vadd.xlane.f32.xlu0 %v299
  %v301 = vpop.xlane.xlu0 %300
  %v302 = vsel %vm74, %v292, 0.0
  %303 = vadd.xlane.f32.xlu0 %v302
  %v304 = vpop.xlane.xlu0 %303
  %v305 = vld [vmem:[#allocation2] sm:$0x1]
  %v307 = vlaneseq
  %v308 = vshrl.u32 %v307, 7
  %v309 = vsub.s32 0, %v308
  %v310 = vrot.slane %v305, %v309
  %v312 = vadd.f32 %v295, %v310
  %v313 = vadd.f32 %v298, %v310
  %v314 = vadd.f32 %v301, %v310
  %v315 = vadd.f32 %v304, %v310
  %vm316 = vcmask 7168
  %317 = vst.msk [vmem:[%s7] sm:$0xff] %vm316, %v312
  %318 = vst.msk [vmem:[%s7 + $0x8] sm:$0xff] %vm316, %v313
  %319 = vst.msk [vmem:[%s7 + $0x10] sm:$0xff] %vm316, %v314
  %320 = vst.msk [vmem:[%s7 + $0x18] sm:$0xff] %vm316, %v315
  // Predicated region
  $region30: #{energy_output.1} parent=0 // pred_check
    _
  $region31: #{energy_output.1} parent=0 // pred_check_branch
    %322 = sbr.rel (0) target = $region33
  $region32: #{energy_output.1} parent=0 // pred_region
    _
  $region33: #{energy_output.1} parent=0 // pred_fallthru
    _
  // Predicated region
  $region34: #{energy_output.1} parent=0 // pred_check
    _
  $region35: #{energy_output.1} parent=0 // pred_check_branch
    %324 = sbr.rel (0) target = $region37
  $region36: #{energy_output.1} parent=0 // pred_region
    _
  $region37: #{energy_output.1} parent=0 // pred_fallthru
    _

</llo_original>
